<compile_context>
chip_gen: v5e
topology: v5e:2x2
jax: 0.10.0
libtpu: 0.0.40
codegen_flags: <defaults>
</compile_context>

<pallas_src>
import functools
import math

import jax
import jax.numpy as jnp
from jax.experimental import pallas as pl
from jax.experimental.pallas import tpu as pltpu

LANE = 128       # TPU lane width
SUBLANE = 8      # f32 sublane packing
TM_DEFAULT = 256  # node-row tile for the conv grid


def _round_up(v, m):
    return (v + m - 1) // m * m


def _nbytes(shape, dtype):
    return math.prod(shape) * jnp.dtype(dtype).itemsize


def _vmem_limit(nbytes_needed):
    # Explicit scoped-VMEM budget: operand footprint * 2 (double buffering +
    # compiler scratch headroom), floored at 32 MiB, capped at v7x physical.
    return int(min(max(2 * nbytes_needed, 32 * 2**20), 64 * 2**20))


# ---------------------------------------------------------------- kernels ---

def _rgcn_conv_kernel(x_ref, a_ref, w_rel_ref, w_root_ref, b_ref, o_ref):
    """One RGCNConv layer (+ ReLU) for one tile of output node rows.

    x_ref:      (NL, C)      bf16, all (padded) node features, VMEM-resident
    a_ref:      (R, TM, NL)  bf16, mean-normalized adjacency rows of this tile
    w_rel_ref:  (R, C, C)    f32
    w_root_ref: (C, C)       f32
    b_ref:      (1, C)       f32
    o_ref:      (TM, C)      f32
    """
    tm = o_ref.shape[0]
    row0 = pl.multiple_of(pl.program_id(0) * tm, tm)

    # root transform + bias on this row tile
    x_tile = x_ref[pl.ds(row0, tm), :]
    acc = jnp.dot(x_tile, w_root_ref[...],
                  preferred_element_type=jnp.float32) + b_ref[...]

    # mean aggregation: sum_r (A_r[tile] @ X) @ W_r.
    # A and X are both bf16 (full-rate MXU); accumulation is f32.
    # TODO(synk): for large relation counts / large graphs, switch to a
    # lax.fori_loop over relations and CSR-style sparse streaming via
    # PrefetchScalarGridSpec instead of the dense O(R*N^2) adjacency.
    x_full = x_ref[...]
    for r in range(a_ref.shape[0]):
        ax = jnp.dot(a_ref[r], x_full, preferred_element_type=jnp.float32)
        acc = acc + jnp.dot(ax, w_rel_ref[r],
                            preferred_element_type=jnp.float32)

    o_ref[...] = jnp.maximum(acc, 0.0)   # spec applies ReLU after both convs


def _head_kernel(num_classes, p_ref, h_ref, mw1_ref, mb1_ref, mw2_ref,
                 mb2_ref, o_ref):
    """global_mean_pool (as matmul) + MLP + log_softmax, fully VMEM-resident."""
    pooled = jnp.dot(p_ref[...], h_ref[...], preferred_element_type=jnp.float32)
    z = jnp.dot(pooled, mw1_ref[...],
                preferred_element_type=jnp.float32) + mb1_ref[...]
    z = jnp.maximum(z, 0.0)
    logits = jnp.dot(z, mw2_ref[...],
                     preferred_element_type=jnp.float32) + mb2_ref[...]

    # mask padded class lanes so they can't enter the softmax denominator;
    # logits are f32, so a finite -1e30 sentinel is safe.
    lane = jax.lax.broadcasted_iota(jnp.int32, logits.shape, 1)
    logits = jnp.where(lane < num_classes, logits, -1e30)

    m = jnp.max(logits, axis=1, keepdims=True)
    s = logits - m
    lse = jnp.log(jnp.sum(jnp.exp(s), axis=1, keepdims=True))
    o_ref[...] = s - lse


# ---------------------------------------------------------------- wrappers --

def rgcn_conv(x_bf16, a_bf16, w_rel, w_root, b, *, tm):
    """Row-tiled RGCNConv + ReLU. Returns f32 hidden of shape (NL, C)."""
    nl, c_pad = x_bf16.shape
    num_rel = a_bf16.shape[0]
    grid = (nl // tm,)

    flops = (2 * num_rel * nl * nl * c_pad            # A_r @ X
             + 2 * num_rel * nl * c_pad * c_pad       # (A_r @ X) @ W_r
             + 2 * nl * c_pad * c_pad)                # X @ W_root
    bytes_accessed = (_nbytes((num_rel, nl, nl), jnp.bfloat16)
                      + _nbytes((nl, c_pad), jnp.bfloat16)
                      + _nbytes((num_rel, c_pad, c_pad), jnp.float32)
                      + _nbytes((c_pad, c_pad), jnp.float32)
                      + _nbytes((1, c_pad), jnp.float32)
                      + _nbytes((nl, c_pad), jnp.float32))
    vmem_needed = (2 * _nbytes((num_rel, tm, nl), jnp.bfloat16)   # A tile x2
                   + 2 * _nbytes((tm, c_pad), jnp.float32)        # out tile x2
                   + _nbytes((nl, c_pad), jnp.bfloat16)           # X
                   + _nbytes((num_rel, c_pad, c_pad), jnp.float32)
                   + _nbytes((c_pad, c_pad), jnp.float32)
                   + _nbytes((1, c_pad), jnp.float32))

    return pl.pallas_call(
        _rgcn_conv_kernel,
        out_shape=jax.ShapeDtypeStruct((nl, c_pad), jnp.float32),
        grid=grid,
        in_specs=[
            pl.BlockSpec((nl, c_pad), lambda i: (0, 0)),              # X (full)
            pl.BlockSpec((num_rel, tm, nl), lambda i: (0, i, 0)),     # A rows
            pl.BlockSpec((num_rel, c_pad, c_pad), lambda i: (0, 0, 0)),
            pl.BlockSpec((c_pad, c_pad), lambda i: (0, 0)),
            pl.BlockSpec((1, c_pad), lambda i: (0, 0)),
        ],
        out_specs=pl.BlockSpec((tm, c_pad), lambda i: (i, 0)),
        compiler_params=pltpu.CompilerParams(
            dimension_semantics=("parallel",),
            vmem_limit_bytes=_vmem_limit(vmem_needed)),
        cost_estimate=pl.CostEstimate(flops=flops, transcendentals=0,
                                      bytes_accessed=bytes_accessed),
    )(x_bf16, a_bf16, w_rel, w_root, b)


def rgcn_head(pool, h, mw1, mb1, mw2, mb2, num_classes):
    g_pad, _nl = pool.shape
    c_pad = h.shape[1]
    vmem_needed = (_nbytes(pool.shape, jnp.float32)
                   + _nbytes(h.shape, jnp.float32)
                   + 3 * _nbytes((c_pad, c_pad), jnp.float32)
                   + _nbytes((g_pad, c_pad), jnp.float32))
    vmem = lambda: pl.BlockSpec(memory_space=pltpu.MemorySpace.VMEM)
    # TODO(synk): for very large graphs, tile the pooling reduction over node
    # rows instead of keeping P and H fully VMEM-resident.
    return pl.pallas_call(
        functools.partial(_head_kernel, num_classes),
        out_shape=jax.ShapeDtypeStruct((g_pad, c_pad), jnp.float32),
        in_specs=[vmem() for _ in range(6)],
        out_specs=vmem(),
        compiler_params=pltpu.CompilerParams(
            vmem_limit_bytes=_vmem_limit(vmem_needed)),
    )(pool, h, mw1, mb1, mw2, mb2)


# ---------------------------------------------------------------- glue ------

def build_graph_operands(edge_index, edge_type, batch, num_nodes,
                         num_relations, num_graphs, nl, g_pad):
    """Densify the sparse graph into the kernel's operand layouts.

    Pure-JAX glue; build once and reuse when the graph structure is static.
    A is returned in bf16 (halves its HBM/VMEM footprint — it is the dominant,
    bandwidth-bound operand); the pooling matrix stays f32.
    """
    src, dst = edge_index[0], edge_index[1]            # messages flow src -> dst

    a = jnp.zeros((num_relations, nl, nl), jnp.float32)
    a = a.at[edge_type, dst, src].add(1.0)              # duplicate edges add up
    deg = jnp.sum(a, axis=-1, keepdims=True)
    a = (a / jnp.maximum(deg, 1.0)).astype(jnp.bfloat16)   # mean aggregation

    p = jnp.zeros((g_pad, nl), jnp.float32)
    p = p.at[batch, jnp.arange(num_nodes)].set(1.0)
    p = p / jnp.maximum(jnp.sum(p, axis=1, keepdims=True), 1.0)
    return a, p


def _pad2(w, r, c):
    return jnp.pad(w, ((0, r - w.shape[0]), (0, c - w.shape[1])))


def pad_params(params, c_pad):
    def pad3(w):
        return jnp.pad(w, ((0, 0), (0, c_pad - w.shape[1]),
                           (0, c_pad - w.shape[2])))
    return {
        "w1_rel": pad3(params["w1_rel"]),
        "w1_root": _pad2(params["w1_root"], c_pad, c_pad),
        "b1": _pad2(params["b1"], 1, c_pad),
        "w2_rel": pad3(params["w2_rel"]),
        "w2_root": _pad2(params["w2_root"], c_pad, c_pad),
        "b2": _pad2(params["b2"], 1, c_pad),
        "mlp_w1": _pad2(params["mlp_w1"], c_pad, c_pad),
        "mlp_b1": _pad2(params["mlp_b1"], 1, c_pad),
        "mlp_w2": _pad2(params["mlp_w2"], c_pad, c_pad),
        "mlp_b2": _pad2(params["mlp_b2"], 1, c_pad),
    }


def rgcn_forward(params, x, edge_index, edge_type, batch,
                 num_relations, num_graphs):
    n, cin = x.shape
    num_classes = params["mlp_w2"].shape[1]
    widths = (cin, params["w1_root"].shape[1], params["w2_root"].shape[1],
              params["mlp_w1"].shape[1], num_classes)
    c_pad = _round_up(max(widths), LANE)
    nl = _round_up(n, LANE)            # padded node count (lane-dense)
    tm = min(TM_DEFAULT, nl)           # node-row tile
    nl = _round_up(nl, tm)             # grid covers nl exactly
    g_pad = _round_up(num_graphs, SUBLANE)

    a, pool = build_graph_operands(edge_index, edge_type, batch, n,
                                   num_relations, num_graphs, nl, g_pad)
    pp = pad_params(params, c_pad)

    # bf16 casts happen here on the XLA side (not in-kernel; v5e has no bf16
    # VPU).  The kernels accumulate in f32 on the MXU.
    x_pad = jnp.pad(x, ((0, nl - n), (0, c_pad - cin))).astype(jnp.bfloat16)

    h1 = rgcn_conv(x_pad, a, pp["w1_rel"], pp["w1_root"], pp["b1"], tm=tm)
    h2 = rgcn_conv(h1.astype(jnp.bfloat16), a, pp["w2_rel"], pp["w2_root"],
                   pp["b2"], tm=tm)
    out_pad = rgcn_head(pool, h2, pp["mlp_w1"], pp["mlp_b1"],
                        pp["mlp_w2"], pp["mlp_b2"], num_classes)
    return out_pad[:num_graphs, :num_classes]


# ---------------------------------------------------------------- reference -

def reference_forward(params, x, edge_index, edge_type, batch,
                      num_relations, num_graphs):
    hp = jax.lax.Precision.HIGHEST
    n = x.shape[0]
    src, dst = edge_index[0], edge_index[1]
    a = jnp.zeros((num_relations, n, n), jnp.float32)
    a = a.at[edge_type, dst, src].add(1.0)
    a = a / jnp.maximum(jnp.sum(a, axis=-1, keepdims=True), 1.0)

    def layer(h, w_rel, w_root, b):
        out = jnp.dot(h, w_root, precision=hp) + b
        out = out + jnp.einsum("rij,jk,rkl->il", a, h, w_rel, precision=hp)
        return jax.nn.relu(out)

    h = layer(x, params["w1_rel"], params["w1_root"], params["b1"])
    h = layer(h, params["w2_rel"], params["w2_root"], params["b2"])
    pmat = jnp.zeros((num_graphs, n), jnp.float32)
    pmat = pmat.at[batch, jnp.arange(n)].set(1.0)
    pmat = pmat / jnp.maximum(jnp.sum(pmat, axis=1, keepdims=True), 1.0)
    pooled = jnp.dot(pmat, h, precision=hp)
    z = jax.nn.relu(jnp.dot(pooled, params["mlp_w1"], precision=hp)
                    + params["mlp_b1"])
    logits = jnp.dot(z, params["mlp_w2"], precision=hp) + params["mlp_b2"]
    return jax.nn.log_softmax(logits, axis=1)


# ---------------------------------------------------------------- main ------

def init_params(key, in_ch, hid_ch, out_ch, mlp_dim, num_classes, num_rel):
    ks = jax.random.split(key, 10)
    s = 0.1
    return {
        "w1_rel":  s * jax.random.normal(ks[0], (num_rel, in_ch, hid_ch), jnp.float32),
        "w1_root": s * jax.random.normal(ks[1], (in_ch, hid_ch), jnp.float32),
        "b1":      s * jax.random.normal(ks[2], (1, hid_ch), jnp.float32),
        "w2_rel":  s * jax.random.normal(ks[3], (num_rel, hid_ch, out_ch), jnp.float32),
        "w2_root": s * jax.random.normal(ks[4], (hid_ch, out_ch), jnp.float32),
        "b2":      s * jax.random.normal(ks[5], (1, out_ch), jnp.float32),
        "mlp_w1":  s * jax.random.normal(ks[6], (out_ch, mlp_dim), jnp.float32),
        "mlp_b1":  s * jax.random.normal(ks[7], (1, mlp_dim), jnp.float32),
        "mlp_w2":  s * jax.random.normal(ks[8], (mlp_dim, num_classes), jnp.float32),
        "mlp_b2":  s * jax.random.normal(ks[9], (1, num_classes), jnp.float32),
    }


if __name__ == "__main__":
    in_channels, hidden_channels, out_channels = 4, 16, 8
    mlp_dim, num_classes, num_relations = 32, 5, 3
    num_nodes, num_edges, num_graphs = 16, 40, 2

    key = jax.random.PRNGKey(0)
    k_x, k_src, k_dst, k_rel, k_p = jax.random.split(key, 5)

    x = jax.random.normal(k_x, (num_nodes, in_channels), jnp.float32)
    src = jax.random.randint(k_src, (num_edges,), 0, num_nodes, jnp.int32)
    dst = jax.random.randint(k_dst, (num_edges,), 0, num_nodes, jnp.int32)
    edge_index = jnp.stack([src, dst], axis=0)                        # (2, E)
    edge_type = jax.random.randint(k_rel, (num_edges,), 0, num_relations, jnp.int32)
    batch = jnp.concatenate([jnp.zeros(num_nodes // 2, jnp.int32),
                             jnp.ones(num_nodes - num_nodes // 2, jnp.int32)])

    params = init_params(k_p, in_channels, hidden_channels, out_channels,
                         mlp_dim, num_classes, num_relations)

    out = rgcn_forward(params, x, edge_index, edge_type, batch,
                       num_relations, num_graphs)
    out = jax.block_until_ready(out)

    assert out.shape == (num_graphs, num_classes)
    # log_softmax rows should exponentiate-sum to ~1
    assert jnp.allclose(jnp.sum(jnp.exp(out), axis=1), 1.0, atol=1e-4)
    # match the pure-JAX reference; tolerance is relaxed because the kernel
    # path uses bf16 A / bf16 activations (and default MXU precision) while
    # the reference runs at Precision.HIGHEST in f32.
    ref = reference_forward(params, x, edge_index, edge_type, batch,
                            num_relations, num_graphs)
    assert jnp.allclose(out, ref, atol=2e-2, rtol=2e-2)
    print("KERNEL_OK")
</pallas_src>

<mosaic_0001>
module attributes {stable_mosaic.version = 11 : i64} {
  func.func @_rgcn_conv_kernel(%arg0: i32, %arg1: memref<128x128xbf16, #tpu.memory_space<vmem>>, %arg2: memref<3x128x128xbf16, #tpu.memory_space<vmem>>, %arg3: memref<3x128x128xf32, #tpu.memory_space<vmem>>, %arg4: memref<128x128xf32, #tpu.memory_space<vmem>>, %arg5: memref<1x128xf32, #tpu.memory_space<vmem>>, %arg6: memref<128x128xf32, #tpu.memory_space<vmem>>) attributes {dimension_semantics = [#tpu.dimension_semantics<parallel>], iteration_bounds = array<i64: 1>, scalar_prefetch = 0 : i64, scratch_operands = 0 : i64, tpu.core_type = #tpu.core_type<tc>, window_params = [{pipeline_mode = #tpu.pipeline_mode<synchronous>, transform_indices = @transform_0, window_bounds = array<i64: 128, 128>}, {transform_indices = @transform_1, window_bounds = array<i64: 3, 128, 128>}, {pipeline_mode = #tpu.pipeline_mode<synchronous>, transform_indices = @transform_2, window_bounds = array<i64: 3, 128, 128>}, {pipeline_mode = #tpu.pipeline_mode<synchronous>, transform_indices = @transform_3, window_bounds = array<i64: 128, 128>}, {pipeline_mode = #tpu.pipeline_mode<synchronous>, transform_indices = @transform_4, window_bounds = array<i64: 1, 128>}, {transform_indices = @transform_5, window_bounds = array<i64: 128, 128>}]} {
    %c128_i32 = arith.constant 128 : i32
    %0 = arith.muli %arg0, %c128_i32 : i32
    %1 = tpu.assume_multiple %0, 128 : i32
    %2 = arith.index_cast %1 : i32 to index
    %c0 = arith.constant 0 : index
    %3 = vector.load %arg1[%2, %c0] : memref<128x128xbf16, #tpu.memory_space<vmem>>, vector<128x128xbf16>
    %c0_0 = arith.constant 0 : index
    %c0_1 = arith.constant 0 : index
    %4 = vector.load %arg4[%c0_0, %c0_1] : memref<128x128xf32, #tpu.memory_space<vmem>>, vector<128x128xf32>
    %cst = arith.constant dense<0.000000e+00> : vector<128x128xf32>
    %5 = tpu.matmul %3, %4, %cst {dimension_numbers = #tpu.dot_dimension_numbers<[1], [0], [0], [1], [0, 0, 1, 1], [], []>} : vector<128x128xbf16>, vector<128x128xf32>, vector<128x128xf32> -> vector<128x128xf32>
    %c0_2 = arith.constant 0 : index
    %c0_3 = arith.constant 0 : index
    %6 = vector.load %arg5[%c0_2, %c0_3] : memref<1x128xf32, #tpu.memory_space<vmem>>, vector<1x128xf32>
    %7 = vector.broadcast %6 : vector<1x128xf32> to vector<128x128xf32>
    %8 = arith.addf %5, %7 : vector<128x128xf32>
    %c0_4 = arith.constant 0 : index
    %c0_5 = arith.constant 0 : index
    %9 = vector.load %arg1[%c0_4, %c0_5] : memref<128x128xbf16, #tpu.memory_space<vmem>>, vector<128x128xbf16>
    %c0_6 = arith.constant 0 : index
    %c0_7 = arith.constant 0 : index
    %c0_8 = arith.constant 0 : index
    %10 = vector.load %arg2[%c0_6, %c0_7, %c0_8] : memref<3x128x128xbf16, #tpu.memory_space<vmem>>, vector<1x128x128xbf16>
    %11 = vector.shape_cast %10 : vector<1x128x128xbf16> to vector<128x128xbf16>
    %cst_9 = arith.constant dense<0.000000e+00> : vector<128x128xf32>
    %12 = tpu.matmul %11, %9, %cst_9 {dimension_numbers = #tpu.dot_dimension_numbers<[1], [0], [0], [1], [0, 0, 1, 1], [], []>} : vector<128x128xbf16>, vector<128x128xbf16>, vector<128x128xf32> -> vector<128x128xf32>
    %c0_10 = arith.constant 0 : index
    %c0_11 = arith.constant 0 : index
    %c0_12 = arith.constant 0 : index
    %13 = vector.load %arg3[%c0_10, %c0_11, %c0_12] : memref<3x128x128xf32, #tpu.memory_space<vmem>>, vector<1x128x128xf32>
    %14 = vector.shape_cast %13 : vector<1x128x128xf32> to vector<128x128xf32>
    %cst_13 = arith.constant dense<0.000000e+00> : vector<128x128xf32>
    %15 = tpu.matmul %12, %14, %cst_13 {dimension_numbers = #tpu.dot_dimension_numbers<[1], [0], [0], [1], [0, 0, 1, 1], [], []>} : vector<128x128xf32>, vector<128x128xf32>, vector<128x128xf32> -> vector<128x128xf32>
    %16 = arith.addf %8, %15 : vector<128x128xf32>
    %c1 = arith.constant 1 : index
    %c0_14 = arith.constant 0 : index
    %c0_15 = arith.constant 0 : index
    %17 = vector.load %arg2[%c1, %c0_14, %c0_15] : memref<3x128x128xbf16, #tpu.memory_space<vmem>>, vector<1x128x128xbf16>
    %18 = vector.shape_cast %17 : vector<1x128x128xbf16> to vector<128x128xbf16>
    %cst_16 = arith.constant dense<0.000000e+00> : vector<128x128xf32>
    %19 = tpu.matmul %18, %9, %cst_16 {dimension_numbers = #tpu.dot_dimension_numbers<[1], [0], [0], [1], [0, 0, 1, 1], [], []>} : vector<128x128xbf16>, vector<128x128xbf16>, vector<128x128xf32> -> vector<128x128xf32>
    %c1_17 = arith.constant 1 : index
    %c0_18 = arith.constant 0 : index
    %c0_19 = arith.constant 0 : index
    %20 = vector.load %arg3[%c1_17, %c0_18, %c0_19] : memref<3x128x128xf32, #tpu.memory_space<vmem>>, vector<1x128x128xf32>
    %21 = vector.shape_cast %20 : vector<1x128x128xf32> to vector<128x128xf32>
    %cst_20 = arith.constant dense<0.000000e+00> : vector<128x128xf32>
    %22 = tpu.matmul %19, %21, %cst_20 {dimension_numbers = #tpu.dot_dimension_numbers<[1], [0], [0], [1], [0, 0, 1, 1], [], []>} : vector<128x128xf32>, vector<128x128xf32>, vector<128x128xf32> -> vector<128x128xf32>
    %23 = arith.addf %16, %22 : vector<128x128xf32>
    %c2 = arith.constant 2 : index
    %c0_21 = arith.constant 0 : index
    %c0_22 = arith.constant 0 : index
    %24 = vector.load %arg2[%c2, %c0_21, %c0_22] : memref<3x128x128xbf16, #tpu.memory_space<vmem>>, vector<1x128x128xbf16>
    %25 = vector.shape_cast %24 : vector<1x128x128xbf16> to vector<128x128xbf16>
    %cst_23 = arith.constant dense<0.000000e+00> : vector<128x128xf32>
    %26 = tpu.matmul %25, %9, %cst_23 {dimension_numbers = #tpu.dot_dimension_numbers<[1], [0], [0], [1], [0, 0, 1, 1], [], []>} : vector<128x128xbf16>, vector<128x128xbf16>, vector<128x128xf32> -> vector<128x128xf32>
    %c2_24 = arith.constant 2 : index
    %c0_25 = arith.constant 0 : index
    %c0_26 = arith.constant 0 : index
    %27 = vector.load %arg3[%c2_24, %c0_25, %c0_26] : memref<3x128x128xf32, #tpu.memory_space<vmem>>, vector<1x128x128xf32>
    %28 = vector.shape_cast %27 : vector<1x128x128xf32> to vector<128x128xf32>
    %cst_27 = arith.constant dense<0.000000e+00> : vector<128x128xf32>
    %29 = tpu.matmul %26, %28, %cst_27 {dimension_numbers = #tpu.dot_dimension_numbers<[1], [0], [0], [1], [0, 0, 1, 1], [], []>} : vector<128x128xf32>, vector<128x128xf32>, vector<128x128xf32> -> vector<128x128xf32>
    %30 = arith.addf %23, %29 : vector<128x128xf32>
    %cst_28 = arith.constant 0.000000e+00 : f32
    %31 = vector.broadcast %cst_28 : f32 to vector<128x128xf32>
    %32 = arith.maximumf %30, %31 : vector<128x128xf32>
    %c0_29 = arith.constant 0 : index
    %c0_30 = arith.constant 0 : index
    %33 = vector.load %arg6[%c0_29, %c0_30] : memref<128x128xf32, #tpu.memory_space<vmem>>, vector<128x128xf32>
    tpu.vector_store %arg6[%c0_29, %c0_30], %32 {strides = array<i32>} : memref<128x128xf32, #tpu.memory_space<vmem>>, vector<128x128xf32>,
    return
  }
  func.func @transform_0(%arg0: i32) -> (i32, i32) {
    %c0_i32 = arith.constant 0 : i32
    %c0_i32_0 = arith.constant 0 : i32
    %c0_i32_1 = arith.constant 0 : i32
    return %c0_i32, %c0_i32_0 : i32, i32
  }
  func.func @transform_1(%arg0: i32) -> (i32, i32, i32) {
    %c0_i32 = arith.constant 0 : i32
    %c0_i32_0 = arith.constant 0 : i32
    %c0_i32_1 = arith.constant 0 : i32
    return %c0_i32, %arg0, %c0_i32_0 : i32, i32, i32
  }
  func.func @transform_2(%arg0: i32) -> (i32, i32, i32) {
    %c0_i32 = arith.constant 0 : i32
    %c0_i32_0 = arith.constant 0 : i32
    %c0_i32_1 = arith.constant 0 : i32
    %c0_i32_2 = arith.constant 0 : i32
    return %c0_i32, %c0_i32_0, %c0_i32_1 : i32, i32, i32
  }
  func.func @transform_3(%arg0: i32) -> (i32, i32) {
    %c0_i32 = arith.constant 0 : i32
    %c0_i32_0 = arith.constant 0 : i32
    %c0_i32_1 = arith.constant 0 : i32
    return %c0_i32, %c0_i32_0 : i32, i32
  }
  func.func @transform_4(%arg0: i32) -> (i32, i32) {
    %c0_i32 = arith.constant 0 : i32
    %c0_i32_0 = arith.constant 0 : i32
    %c0_i32_1 = arith.constant 0 : i32
    return %c0_i32, %c0_i32_0 : i32, i32
  }
  func.func @transform_5(%arg0: i32) -> (i32, i32) {
    %c0_i32 = arith.constant 0 : i32
    %c0_i32_0 = arith.constant 0 : i32
    return %arg0, %c0_i32 : i32, i32
  }
}

</mosaic_0001>

<llo_original>
// kernel: tpu_custom_call.1
$region0: #{tpu_custom_call.1}
  #allocation0 [shape = 'u32[]', space=smem, size = 0x4, offset = 0x4, fixed_abs, tag = 'smem constant byte address 0x4 - core index']
  #allocation1 [shape = 'u32[72,128]{1,0:T(1,128)}', space=vmem, size = 0x9000, scoped, tag = 'internal scratch']
  %s0 = inlined_call_operand.hbm [shape: bf16[128,128], index: 0, kind: input, shape index: {}]
  %s1 = inlined_call_operand.hbm [shape: bf16[3,128,128], index: 1, kind: input, shape index: {}]
  %s2 = inlined_call_operand.hbm [shape: f32[3,128,128], index: 2, kind: input, shape index: {}]
  %s3 = inlined_call_operand.hbm [shape: f32[128,128], index: 3, kind: input, shape index: {}]
  %s4 = inlined_call_operand.vmem [shape: f32[1,128], index: 4, kind: input, shape index: {}]
  %s5 = inlined_call_operand.hbm [shape: f32[128,128], index: 5, kind: output, shape index: {}]
  %s6 = sld [smem:[#allocation0]]
  $region46: #{tpu_custom_call.1} parent=0
    _
  %s8 = ssub.s32 1, %s6
  %s9 = scalar_select 0, %s8, %s6
  $region1: #{tpu_custom_call.1} parent=0
    #allocation2 [shape = 'u8[32768]{0}', space=vmem, size = 0x8000, scoped, tag = 'input window, operand 0, single buffered']
    #allocation3 [shape = 's32[1]{0}', space=sflag, size = 0x4, scoped, tag = 'scoped memory for tpu_custom_call.1']
    #allocation4 [shape = 's32[1]{0}', space=sflag, size = 0x4, scoped, tag = 'scoped memory for tpu_custom_call.1']
    #allocation5 [shape = 'u8[98304]{0}', space=vmem, size = 0x18000, scoped, tag = 'input window, operand 1, single buffered']
    #allocation6 [shape = 's32[1]{0}', space=sflag, size = 0x4, scoped, tag = 'scoped memory for tpu_custom_call.1']
    #allocation7 [shape = 'u8[196608]{0}', space=vmem, size = 0x30000, scoped, tag = 'input window, operand 2, single buffered']
    #allocation8 [shape = 'u8[65536]{0}', space=vmem, size = 0x10000, scoped, tag = 'input window, operand 3, single buffered']
    #allocation9 [shape = 's32[1]{0}', space=sflag, size = 0x4, scoped, tag = 'scoped memory for tpu_custom_call.1']
    #allocation10 [shape = 'u8[65536]{0}', space=vmem, size = 0x10000, scoped, tag = 'output window, operand 0, single buffered']
    %10 = vsyncpa [#allocation3], 0
    %11 = vsyncpa [#allocation6], 0
    %12 = vsyncpa [#allocation9], 0
    %13 = vsyncpa [#allocation4], 0
    // Predicated region
    $region2: #{tpu_custom_call.1} parent=1 // pred_check
      _
    $region3: #{tpu_custom_call.1} parent=1 // pred_check_branch
      %15 = sbr.rel (0) target = $region5
    $region4: #{tpu_custom_call.1} parent=1 // pred_region
      %17 = vsyncadd [#allocation3], 0
      %s18 = sshll.u32 %s0, 4
      %s19 = int_to_ptr.hbm [resolvable:$true] %s18
      %s20 = sshll.u32 [#allocation2], 4
      %s21 = int_to_ptr.vmem [resolvable:$true] %s20
      %26 = dma.hbm_to_vmem [thread:$0]  %s19, 1024, %s21, [#allocation3], 64, 64, 4
    $region5: #{tpu_custom_call.1} parent=1 // pred_fallthru
      _
    // Predicated region
    $region6: #{tpu_custom_call.1} parent=1 // pred_check
      _
    $region7: #{tpu_custom_call.1} parent=1 // pred_check_branch
      %28 = sbr.rel (0) target = $region9
    $region8: #{tpu_custom_call.1} parent=1 // pred_region
      %30 = vsyncadd [#allocation6], 0
      %s31 = sshll.u32 %s1, 4
      %s32 = int_to_ptr.hbm [resolvable:$true] %s31
      %s33 = sshll.u32 [#allocation5], 4
      %s34 = int_to_ptr.vmem [resolvable:$true] %s33
      %39 = dma.hbm_to_vmem [thread:$0]  %s32, 3072, %s34, [#allocation6], 64, 64, 4
    $region9: #{tpu_custom_call.1} parent=1 // pred_fallthru
      _
    // Predicated region
    $region10: #{tpu_custom_call.1} parent=1 // pred_check
      _
    $region11: #{tpu_custom_call.1} parent=1 // pred_check_branch
      %41 = sbr.rel (0) target = $region13
    $region12: #{tpu_custom_call.1} parent=1 // pred_region
      %43 = vsyncadd [#allocation6], 0
      %s44 = sshll.u32 %s2, 4
      %s45 = int_to_ptr.hbm [resolvable:$true] %s44
      %s46 = sshll.u32 [#allocation7], 4
      %s47 = int_to_ptr.vmem [resolvable:$true] %s46
      %52 = dma.hbm_to_vmem [thread:$0]  %s45, 6144, %s47, [#allocation6], 128, 128, 8
    $region13: #{tpu_custom_call.1} parent=1 // pred_fallthru
      _
    // Predicated region
    $region14: #{tpu_custom_call.1} parent=1 // pred_check
      _
    $region15: #{tpu_custom_call.1} parent=1 // pred_check_branch
      %54 = sbr.rel (0) target = $region17
    $region16: #{tpu_custom_call.1} parent=1 // pred_region
      %56 = vsyncadd [#allocation9], 0
      %s57 = sshll.u32 %s3, 4
      %s58 = int_to_ptr.hbm [resolvable:$true] %s57
      %s59 = sshll.u32 [#allocation8], 4
      %s60 = int_to_ptr.vmem [resolvable:$true] %s59
      %65 = dma.hbm_to_vmem [thread:$0]  %s58, 2048, %s60, [#allocation9], 128, 128, 8
    $region17: #{tpu_custom_call.1} parent=1 // pred_fallthru
      _
    // Predicated region
    $region18: #{tpu_custom_call.1} parent=1 // pred_check
      _
    $region19: #{tpu_custom_call.1} parent=1 // pred_check_branch
      %67 = sbr.rel (0) target = $region21
    $region20: #{tpu_custom_call.1} parent=1 // pred_region
      _
    $region21: #{tpu_custom_call.1} parent=1 // pred_fallthru
      _
    // Predicated region
    $region22: #{tpu_custom_call.1} parent=1 // pred_check
      _
    $region23: #{tpu_custom_call.1} parent=1 // pred_check_branch
      %69 = sbr.rel (0) target = $region25
    $region24: #{tpu_custom_call.1} parent=1 // pred_region
      %71 = dma.done [#allocation3], 1024
    $region25: #{tpu_custom_call.1} parent=1 // pred_fallthru
      _
    // Predicated region
    $region26: #{tpu_custom_call.1} parent=1 // pred_check
      _
    $region27: #{tpu_custom_call.1} parent=1 // pred_check_branch
      %73 = sbr.rel (0) target = $region29
    $region28: #{tpu_custom_call.1} parent=1 // pred_region
      %75 = dma.done [#allocation6], 3072
    $region29: #{tpu_custom_call.1} parent=1 // pred_fallthru
      _
    // Predicated region
    $region30: #{tpu_custom_call.1} parent=1 // pred_check
      _
    $region31: #{tpu_custom_call.1} parent=1 // pred_check_branch
      %77 = sbr.rel (0) target = $region33
    $region32: #{tpu_custom_call.1} parent=1 // pred_region
      %79 = dma.done [#allocation6], 6144
    $region33: #{tpu_custom_call.1} parent=1 // pred_fallthru
      _
    // Predicated region
    $region34: #{tpu_custom_call.1} parent=1 // pred_check
      _
    $region35: #{tpu_custom_call.1} parent=1 // pred_check_branch
      %81 = sbr.rel (0) target = $region37
    $region36: #{tpu_custom_call.1} parent=1 // pred_region
      %83 = dma.done [#allocation9], 2048
    $region37: #{tpu_custom_call.1} parent=1 // pred_fallthru
      _
    %s84 = smul.u32 0, 128
    %s85 = sshra.s32 %s84, 3
    %s86 = sand.u32 %s84, 7
    %s87 = smul.addr %s85, 4
    %s88 = scalar_lea.vmem [#allocation2], %s87
    %v89 = vld [vmem:[%s88] sm:$0xf]
    %v90 = vld [vmem:[%s88 + $0x4] sm:$0xf]
    %v91 = vld [vmem:[%s88 + $0x8] sm:$0xf]
    %v92 = vld [vmem:[%s88 + $0xc] sm:$0xf]
    %v93 = vld [vmem:[%s88 + $0x10] sm:$0xf]
    %v94 = vld [vmem:[%s88 + $0x14] sm:$0xf]
    %v95 = vld [vmem:[%s88 + $0x18] sm:$0xf]
    %v96 = vld [vmem:[%s88 + $0x1c] sm:$0xf]
    %v97 = vld [vmem:[%s88 + $0x20] sm:$0xf]
    %v98 = vld [vmem:[%s88 + $0x24] sm:$0xf]
    %v99 = vld [vmem:[%s88 + $0x28] sm:$0xf]
    %v100 = vld [vmem:[%s88 + $0x2c] sm:$0xf]
    %v101 = vld [vmem:[%s88 + $0x30] sm:$0xf]
    %v102 = vld [vmem:[%s88 + $0x34] sm:$0xf]
    %v103 = vld [vmem:[%s88 + $0x38] sm:$0xf]
    %v104 = vld [vmem:[%s88 + $0x3c] sm:$0xf]
    %v105 = vld [vmem:[#allocation8] sm:$0xff]
    %v106 = vld [vmem:[#allocation8 + $0x8] sm:$0xff]
    %v107 = vld [vmem:[#allocation8 + $0x10] sm:$0xff]
    %v108 = vld [vmem:[#allocation8 + $0x18] sm:$0xff]
    %v109 = vld [vmem:[#allocation8 + $0x20] sm:$0xff]
    %v110 = vld [vmem:[#allocation8 + $0x28] sm:$0xff]
    %v111 = vld [vmem:[#allocation8 + $0x30] sm:$0xff]
    %v112 = vld [vmem:[#allocation8 + $0x38] sm:$0xff]
    %v113 = vld [vmem:[#allocation8 + $0x40] sm:$0xff]
    %v114 = vld [vmem:[#allocation8 + $0x48] sm:$0xff]
    %v115 = vld [vmem:[#allocation8 + $0x50] sm:$0xff]
    %v116 = vld [vmem:[#allocation8 + $0x58] sm:$0xff]
    %v117 = vld [vmem:[#allocation8 + $0x60] sm:$0xff]
    %v118 = vld [vmem:[#allocation8 + $0x68] sm:$0xff]
    %v119 = vld [vmem:[#allocation8 + $0x70] sm:$0xff]
    %v120 = vld [vmem:[#allocation8 + $0x78] sm:$0xff]
    %v121 = vld [vmem:[%s4] sm:$0x1]
    %v123 = vperm.slane %v121, 0
    %v141 = vunpack.c.l.b16 %v89
    %v142 = vunpack.c.l.b16 %v90
    %v143 = vunpack.c.l.b16 %v91
    %v144 = vunpack.c.l.b16 %v92
    %v145 = vunpack.c.l.b16 %v93
    %v146 = vunpack.c.l.b16 %v94
    %v147 = vunpack.c.l.b16 %v95
    %v148 = vunpack.c.l.b16 %v96
    %v149 = vunpack.c.l.b16 %v97
    %v150 = vunpack.c.l.b16 %v98
    %v151 = vunpack.c.l.b16 %v99
    %v152 = vunpack.c.l.b16 %v100
    %v153 = vunpack.c.l.b16 %v101
    %v154 = vunpack.c.l.b16 %v102
    %v155 = vunpack.c.l.b16 %v103
    %v156 = vunpack.c.l.b16 %v104
    %v157 = vpack.c.b16 %v142, %v141
    %v158 = vpack.c.b16 %v144, %v143
    %v159 = vpack.c.b16 %v146, %v145
    %v160 = vpack.c.b16 %v148, %v147
    %v161 = vpack.c.b16 %v150, %v149
    %v162 = vpack.c.b16 %v152, %v151
    %v163 = vpack.c.b16 %v154, %v153
    %v164 = vpack.c.b16 %v156, %v155
    %173 = vmatpush.msra.mxu0 %v120
    %174 = vmatpush.msra.mxu0 %v119
    %175 = vmatpush.msra.mxu0 %v118
    %176 = vmatpush.msra.mxu0 %v117
    %177 = vmatpush.msra.mxu0 %v116
    %178 = vmatpush.msra.mxu0 %v115
    %179 = vmatpush.msra.mxu0 %v114
    %180 = vmatpush.msra.mxu0 %v113
    %181 = vmatpush.msra.mxu0 %v112
    %182 = vmatpush.msra.mxu0 %v111
    %183 = vmatpush.msra.mxu0 %v110
    %184 = vmatpush.msra.mxu0 %v109
    %185 = vmatpush.msra.mxu0 %v108
    %186 = vmatpush.msra.mxu0 %v107
    %187 = vmatpush.msra.mxu0 %v106
    %188 = vmatpush.msra.mxu0 %v105
    %189 = vmatmul.bf16.gmra.mxu0 %v157
    %v190 = vpop.f32.mrf.mxu0
    %v191 = vadd.f32 %v123, %v190
    %v192 = vpop.f32.mrf.mxu0
    %v193 = vadd.f32 %v123, %v192
    %194 = vmatmul.bf16.gmra.mxu0 %v158
    %v195 = vpop.f32.mrf.mxu0
    %v196 = vadd.f32 %v123, %v195
    %v197 = vpop.f32.mrf.mxu0
    %v198 = vadd.f32 %v123, %v197
    %199 = vmatmul.bf16.gmra.mxu0 %v159
    %v200 = vpop.f32.mrf.mxu0
    %v201 = vadd.f32 %v123, %v200
    %v202 = vpop.f32.mrf.mxu0
    %v203 = vadd.f32 %v123, %v202
    %204 = vmatmul.bf16.gmra.mxu0 %v160
    %v205 = vpop.f32.mrf.mxu0
    %v206 = vadd.f32 %v123, %v205
    %v207 = vpop.f32.mrf.mxu0
    %v208 = vadd.f32 %v123, %v207
    %209 = vmatmul.bf16.gmra.mxu0 %v161
    %v210 = vpop.f32.mrf.mxu0
    %v211 = vadd.f32 %v123, %v210
    %v212 = vpop.f32.mrf.mxu0
    %v213 = vadd.f32 %v123, %v212
    %214 = vmatmul.bf16.gmra.mxu0 %v162
    %v215 = vpop.f32.mrf.mxu0
    %v216 = vadd.f32 %v123, %v215
    %v217 = vpop.f32.mrf.mxu0
    %v218 = vadd.f32 %v123, %v217
    %219 = vmatmul.bf16.gmra.mxu0 %v163
    %v220 = vpop.f32.mrf.mxu0
    %v221 = vadd.f32 %v123, %v220
    %v222 = vpop.f32.mrf.mxu0
    %v223 = vadd.f32 %v123, %v222
    %224 = vmatmul.bf16.gmra.mxu0 %v164
    %v225 = vpop.f32.mrf.mxu0
    %v226 = vadd.f32 %v123, %v225
    %v227 = vpop.f32.mrf.mxu0
    %v228 = vadd.f32 %v123, %v227
    %229 = vdwg.mxu0
    %v230 = vld [vmem:[#allocation2] sm:$0xf]
    %v231 = vld [vmem:[#allocation2 + $0x4] sm:$0xf]
    %v232 = vld [vmem:[#allocation2 + $0x8] sm:$0xf]
    %v233 = vld [vmem:[#allocation2 + $0xc] sm:$0xf]
    %v234 = vld [vmem:[#allocation2 + $0x10] sm:$0xf]
    %v235 = vld [vmem:[#allocation2 + $0x14] sm:$0xf]
    %v236 = vld [vmem:[#allocation2 + $0x18] sm:$0xf]
    %v237 = vld [vmem:[#allocation2 + $0x1c] sm:$0xf]
    %v238 = vld [vmem:[#allocation2 + $0x20] sm:$0xf]
    %v239 = vld [vmem:[#allocation2 + $0x24] sm:$0xf]
    %v240 = vld [vmem:[#allocation2 + $0x28] sm:$0xf]
    %v241 = vld [vmem:[#allocation2 + $0x2c] sm:$0xf]
    %v242 = vld [vmem:[#allocation2 + $0x30] sm:$0xf]
    %v243 = vld [vmem:[#allocation2 + $0x34] sm:$0xf]
    %v244 = vld [vmem:[#allocation2 + $0x38] sm:$0xf]
    %v245 = vld [vmem:[#allocation2 + $0x3c] sm:$0xf]
    %v246 = vld [vmem:[#allocation5] sm:$0xf]
    %v247 = vld [vmem:[#allocation5 + $0x4] sm:$0xf]
    %v248 = vld [vmem:[#allocation5 + $0x8] sm:$0xf]
    %v249 = vld [vmem:[#allocation5 + $0xc] sm:$0xf]
    %v250 = vld [vmem:[#allocation5 + $0x10] sm:$0xf]
    %v251 = vld [vmem:[#allocation5 + $0x14] sm:$0xf]
    %v252 = vld [vmem:[#allocation5 + $0x18] sm:$0xf]
    %v253 = vld [vmem:[#allocation5 + $0x1c] sm:$0xf]
    %v254 = vld [vmem:[#allocation5 + $0x20] sm:$0xf]
    %v255 = vld [vmem:[#allocation5 + $0x24] sm:$0xf]
    %v256 = vld [vmem:[#allocation5 + $0x28] sm:$0xf]
    %v257 = vld [vmem:[#allocation5 + $0x2c] sm:$0xf]
    %v258 = vld [vmem:[#allocation5 + $0x30] sm:$0xf]
    %v259 = vld [vmem:[#allocation5 + $0x34] sm:$0xf]
    %v260 = vld [vmem:[#allocation5 + $0x38] sm:$0xf]
    %v261 = vld [vmem:[#allocation5 + $0x3c] sm:$0xf]
    %v278 = vunpack.c.l.b16 %v246
    %v279 = vunpack.c.l.b16 %v247
    %v280 = vunpack.c.l.b16 %v248
    %v281 = vunpack.c.l.b16 %v249
    %v282 = vunpack.c.l.b16 %v250
    %v283 = vunpack.c.l.b16 %v251
    %v284 = vunpack.c.l.b16 %v252
    %v285 = vunpack.c.l.b16 %v253
    %v286 = vunpack.c.l.b16 %v254
    %v287 = vunpack.c.l.b16 %v255
    %v288 = vunpack.c.l.b16 %v256
    %v289 = vunpack.c.l.b16 %v257
    %v290 = vunpack.c.l.b16 %v258
    %v291 = vunpack.c.l.b16 %v259
    %v292 = vunpack.c.l.b16 %v260
    %v293 = vunpack.c.l.b16 %v261
    %v294 = vpack.c.b16 %v279, %v278
    %v295 = vpack.c.b16 %v281, %v280
    %v296 = vpack.c.b16 %v283, %v282
    %v297 = vpack.c.b16 %v285, %v284
    %v298 = vpack.c.b16 %v287, %v286
    %v299 = vpack.c.b16 %v289, %v288
    %v300 = vpack.c.b16 %v291, %v290
    %v301 = vpack.c.b16 %v293, %v292
    %v326 = vunpack.c.l.b16 %v230
    %v327 = vunpack.c.l.b16 %v231
    %v328 = vunpack.c.l.b16 %v232
    %v329 = vunpack.c.l.b16 %v233
    %v330 = vunpack.c.l.b16 %v234
    %v331 = vunpack.c.l.b16 %v235
    %v332 = vunpack.c.l.b16 %v236
    %v333 = vunpack.c.l.b16 %v237
    %v334 = vunpack.c.l.b16 %v238
    %v335 = vunpack.c.l.b16 %v239
    %v336 = vunpack.c.l.b16 %v240
    %v337 = vunpack.c.l.b16 %v241
    %v338 = vunpack.c.l.b16 %v242
    %v339 = vunpack.c.l.b16 %v243
    %v340 = vunpack.c.l.b16 %v244
    %v341 = vunpack.c.l.b16 %v245
    %v342 = vpack.c.b16 %v327, %v326
    %v343 = vpack.c.b16 %v329, %v328
    %v344 = vpack.c.b16 %v331, %v330
    %v345 = vpack.c.b16 %v333, %v332
    %v346 = vpack.c.b16 %v335, %v334
    %v347 = vpack.c.b16 %v337, %v336
    %v348 = vpack.c.b16 %v339, %v338
    %v349 = vpack.c.b16 %v341, %v340
    %358 = vmatpush.bf16.msra.mxu0 %v349
    %359 = vmatpush.bf16.msra.mxu0 %v348
    %360 = vmatpush.bf16.msra.mxu0 %v347
    %361 = vmatpush.bf16.msra.mxu0 %v346
    %362 = vmatpush.bf16.msra.mxu0 %v345
    %363 = vmatpush.bf16.msra.mxu0 %v344
    %364 = vmatpush.bf16.msra.mxu0 %v343
    %365 = vmatpush.bf16.msra.mxu0 %v342
    %366 = vmatmul.bf16.gmra.mxu0 %v294
    %v367 = vpop.f32.mrf.mxu0
    %v368 = vadd.f32 0.0, %v367
    %v369 = vpop.f32.mrf.mxu0
    %v370 = vadd.f32 0.0, %v369
    %371 = vmatmul.bf16.gmra.mxu0 %v295
    %v372 = vpop.f32.mrf.mxu0
    %v373 = vadd.f32 0.0, %v372
    %v374 = vpop.f32.mrf.mxu0
    %v375 = vadd.f32 0.0, %v374
    %376 = vmatmul.bf16.gmra.mxu0 %v296
    %v377 = vpop.f32.mrf.mxu0
    %v378 = vadd.f32 0.0, %v377
    %v379 = vpop.f32.mrf.mxu0
    %v380 = vadd.f32 0.0, %v379
    %381 = vmatmul.bf16.gmra.mxu0 %v297
    %v382 = vpop.f32.mrf.mxu0
    %v383 = vadd.f32 0.0, %v382
    %v384 = vpop.f32.mrf.mxu0
    %v385 = vadd.f32 0.0, %v384
    %386 = vmatmul.bf16.gmra.mxu0 %v298
    %v387 = vpop.f32.mrf.mxu0
    %v388 = vadd.f32 0.0, %v387
    %v389 = vpop.f32.mrf.mxu0
    %v390 = vadd.f32 0.0, %v389
    %391 = vmatmul.bf16.gmra.mxu0 %v299
    %v392 = vpop.f32.mrf.mxu0
    %v393 = vadd.f32 0.0, %v392
    %v394 = vpop.f32.mrf.mxu0
    %v395 = vadd.f32 0.0, %v394
    %396 = vmatmul.bf16.gmra.mxu0 %v300
    %v397 = vpop.f32.mrf.mxu0
    %v398 = vadd.f32 0.0, %v397
    %v399 = vpop.f32.mrf.mxu0
    %v400 = vadd.f32 0.0, %v399
    %401 = vmatmul.bf16.gmra.mxu0 %v301
    %v402 = vpop.f32.mrf.mxu0
    %v403 = vadd.f32 0.0, %v402
    %v404 = vpop.f32.mrf.mxu0
    %v405 = vadd.f32 0.0, %v404
    %406 = vdwg.mxu0
    %v407 = vld [vmem:[#allocation7] sm:$0xff]
    %v408 = vld [vmem:[#allocation7 + $0x8] sm:$0xff]
    %v409 = vld [vmem:[#allocation7 + $0x10] sm:$0xff]
    %v410 = vld [vmem:[#allocation7 + $0x18] sm:$0xff]
    %v411 = vld [vmem:[#allocation7 + $0x20] sm:$0xff]
    %v412 = vld [vmem:[#allocation7 + $0x28] sm:$0xff]
    %v413 = vld [vmem:[#allocation7 + $0x30] sm:$0xff]
    %v414 = vld [vmem:[#allocation7 + $0x38] sm:$0xff]
    %v415 = vld [vmem:[#allocation7 + $0x40] sm:$0xff]
    %v416 = vld [vmem:[#allocation7 + $0x48] sm:$0xff]
    %v417 = vld [vmem:[#allocation7 + $0x50] sm:$0xff]
    %v418 = vld [vmem:[#allocation7 + $0x58] sm:$0xff]
    %v419 = vld [vmem:[#allocation7 + $0x60] sm:$0xff]
    %v420 = vld [vmem:[#allocation7 + $0x68] sm:$0xff]
    %v421 = vld [vmem:[#allocation7 + $0x70] sm:$0xff]
    %v422 = vld [vmem:[#allocation7 + $0x78] sm:$0xff]
    %423 = vmatpush.msra.mxu0 %v422
    %424 = vmatpush.msra.mxu0 %v421
    %425 = vmatpush.msra.mxu0 %v420
    %426 = vmatpush.msra.mxu0 %v419
    %427 = vmatpush.msra.mxu0 %v418
    %428 = vmatpush.msra.mxu0 %v417
    %429 = vmatpush.msra.mxu0 %v416
    %430 = vmatpush.msra.mxu0 %v415
    %431 = vmatpush.msra.mxu0 %v414
    %432 = vmatpush.msra.mxu0 %v413
    %433 = vmatpush.msra.mxu0 %v412
    %434 = vmatpush.msra.mxu0 %v411
    %435 = vmatpush.msra.mxu0 %v410
    %436 = vmatpush.msra.mxu0 %v409
    %437 = vmatpush.msra.mxu0 %v408
    %438 = vmatpush.msra.mxu0 %v407
    %439 = vmatmul.f32.gmra.mxu0 %v368
    %v440 = vpop.f32.mrf.mxu0
    %v441 = vadd.f32 0.0, %v440
    %442 = vmatmul.f32.gmra.mxu0 %v370
    %v443 = vpop.f32.mrf.mxu0
    %v444 = vadd.f32 0.0, %v443
    %445 = vmatmul.f32.gmra.mxu0 %v373
    %v446 = vpop.f32.mrf.mxu0
    %v447 = vadd.f32 0.0, %v446
    %448 = vmatmul.f32.gmra.mxu0 %v375
    %v449 = vpop.f32.mrf.mxu0
    %v450 = vadd.f32 0.0, %v449
    %451 = vmatmul.f32.gmra.mxu0 %v378
    %v452 = vpop.f32.mrf.mxu0
    %v453 = vadd.f32 0.0, %v452
    %454 = vmatmul.f32.gmra.mxu0 %v380
    %v455 = vpop.f32.mrf.mxu0
    %v456 = vadd.f32 0.0, %v455
    %457 = vmatmul.f32.gmra.mxu0 %v383
    %v458 = vpop.f32.mrf.mxu0
    %v459 = vadd.f32 0.0, %v458
    %460 = vmatmul.f32.gmra.mxu0 %v385
    %v461 = vpop.f32.mrf.mxu0
    %v462 = vadd.f32 0.0, %v461
    %463 = vmatmul.f32.gmra.mxu0 %v388
    %v464 = vpop.f32.mrf.mxu0
    %v465 = vadd.f32 0.0, %v464
    %466 = vmatmul.f32.gmra.mxu0 %v390
    %v467 = vpop.f32.mrf.mxu0
    %v468 = vadd.f32 0.0, %v467
    %469 = vmatmul.f32.gmra.mxu0 %v393
    %v470 = vpop.f32.mrf.mxu0
    %v471 = vadd.f32 0.0, %v470
    %472 = vmatmul.f32.gmra.mxu0 %v395
    %v473 = vpop.f32.mrf.mxu0
    %v474 = vadd.f32 0.0, %v473
    %475 = vmatmul.f32.gmra.mxu0 %v398
    %v476 = vpop.f32.mrf.mxu0
    %v477 = vadd.f32 0.0, %v476
    %478 = vmatmul.f32.gmra.mxu0 %v400
    %v479 = vpop.f32.mrf.mxu0
    %v480 = vadd.f32 0.0, %v479
    %481 = vmatmul.f32.gmra.mxu0 %v403
    %v482 = vpop.f32.mrf.mxu0
    %v483 = vadd.f32 0.0, %v482
    %484 = vmatmul.f32.gmra.mxu0 %v405
    %v485 = vpop.f32.mrf.mxu0
    %v486 = vadd.f32 0.0, %v485
    %487 = vdwg.mxu0
    %v488 = vadd.f32 %v191, %v441
    %v489 = vadd.f32 %v193, %v444
    %v490 = vadd.f32 %v196, %v447
    %v491 = vadd.f32 %v198, %v450
    %v492 = vadd.f32 %v201, %v453
    %v493 = vadd.f32 %v203, %v456
    %v494 = vadd.f32 %v206, %v459
    %v495 = vadd.f32 %v208, %v462
    %v496 = vadd.f32 %v211, %v465
    %v497 = vadd.f32 %v213, %v468
    %v498 = vadd.f32 %v216, %v471
    %v499 = vadd.f32 %v218, %v474
    %v500 = vadd.f32 %v221, %v477
    %v501 = vadd.f32 %v223, %v480
    %v502 = vadd.f32 %v226, %v483
    %v503 = vadd.f32 %v228, %v486
    %s504 = scalar_lea.vmem [#allocation5], 64
    %v505 = vld [vmem:[%s504] sm:$0xf]
    %v506 = vld [vmem:[%s504 + $0x4] sm:$0xf]
    %v507 = vld [vmem:[%s504 + $0x8] sm:$0xf]
    %v508 = vld [vmem:[%s504 + $0xc] sm:$0xf]
    %v509 = vld [vmem:[%s504 + $0x10] sm:$0xf]
    %v510 = vld [vmem:[%s504 + $0x14] sm:$0xf]
    %v511 = vld [vmem:[%s504 + $0x18] sm:$0xf]
    %v512 = vld [vmem:[%s504 + $0x1c] sm:$0xf]
    %v513 = vld [vmem:[%s504 + $0x20] sm:$0xf]
    %v514 = vld [vmem:[%s504 + $0x24] sm:$0xf]
    %v515 = vld [vmem:[%s504 + $0x28] sm:$0xf]
    %v516 = vld [vmem:[%s504 + $0x2c] sm:$0xf]
    %v517 = vld [vmem:[%s504 + $0x30] sm:$0xf]
    %v518 = vld [vmem:[%s504 + $0x34] sm:$0xf]
    %v519 = vld [vmem:[%s504 + $0x38] sm:$0xf]
    %v520 = vld [vmem:[%s504 + $0x3c] sm:$0xf]
    %v537 = vunpack.c.l.b16 %v505
    %v538 = vunpack.c.l.b16 %v506
    %v539 = vunpack.c.l.b16 %v507
    %v540 = vunpack.c.l.b16 %v508
    %v541 = vunpack.c.l.b16 %v509
    %v542 = vunpack.c.l.b16 %v510
    %v543 = vunpack.c.l.b16 %v511
    %v544 = vunpack.c.l.b16 %v512
    %v545 = vunpack.c.l.b16 %v513
    %v546 = vunpack.c.l.b16 %v514
    %v547 = vunpack.c.l.b16 %v515
    %v548 = vunpack.c.l.b16 %v516
    %v549 = vunpack.c.l.b16 %v517
    %v550 = vunpack.c.l.b16 %v518
    %v551 = vunpack.c.l.b16 %v519
    %v552 = vunpack.c.l.b16 %v520
    %v553 = vpack.c.b16 %v538, %v537
    %v554 = vpack.c.b16 %v540, %v539
    %v555 = vpack.c.b16 %v542, %v541
    %v556 = vpack.c.b16 %v544, %v543
    %v557 = vpack.c.b16 %v546, %v545
    %v558 = vpack.c.b16 %v548, %v547
    %v559 = vpack.c.b16 %v550, %v549
    %v560 = vpack.c.b16 %v552, %v551
    %569 = vmatpush.bf16.msra.mxu0 %v349
    %570 = vmatpush.bf16.msra.mxu0 %v348
    %571 = vmatpush.bf16.msra.mxu0 %v347
    %572 = vmatpush.bf16.msra.mxu0 %v346
    %573 = vmatpush.bf16.msra.mxu0 %v345
    %574 = vmatpush.bf16.msra.mxu0 %v344
    %575 = vmatpush.bf16.msra.mxu0 %v343
    %576 = vmatpush.bf16.msra.mxu0 %v342
    %577 = vmatmul.bf16.gmra.mxu0 %v553
    %v578 = vpop.f32.mrf.mxu0
    %v579 = vadd.f32 0.0, %v578
    %v580 = vpop.f32.mrf.mxu0
    %v581 = vadd.f32 0.0, %v580
    %582 = vmatmul.bf16.gmra.mxu0 %v554
    %v583 = vpop.f32.mrf.mxu0
    %v584 = vadd.f32 0.0, %v583
    %v585 = vpop.f32.mrf.mxu0
    %v586 = vadd.f32 0.0, %v585
    %587 = vmatmul.bf16.gmra.mxu0 %v555
    %v588 = vpop.f32.mrf.mxu0
    %v589 = vadd.f32 0.0, %v588
    %v590 = vpop.f32.mrf.mxu0
    %v591 = vadd.f32 0.0, %v590
    %592 = vmatmul.bf16.gmra.mxu0 %v556
    %v593 = vpop.f32.mrf.mxu0
    %v594 = vadd.f32 0.0, %v593
    %v595 = vpop.f32.mrf.mxu0
    %v596 = vadd.f32 0.0, %v595
    %597 = vmatmul.bf16.gmra.mxu0 %v557
    %v598 = vpop.f32.mrf.mxu0
    %v599 = vadd.f32 0.0, %v598
    %v600 = vpop.f32.mrf.mxu0
    %v601 = vadd.f32 0.0, %v600
    %602 = vmatmul.bf16.gmra.mxu0 %v558
    %v603 = vpop.f32.mrf.mxu0
    %v604 = vadd.f32 0.0, %v603
    %v605 = vpop.f32.mrf.mxu0
    %v606 = vadd.f32 0.0, %v605
    %607 = vmatmul.bf16.gmra.mxu0 %v559
    %v608 = vpop.f32.mrf.mxu0
    %v609 = vadd.f32 0.0, %v608
    %v610 = vpop.f32.mrf.mxu0
    %v611 = vadd.f32 0.0, %v610
    %612 = vmatmul.bf16.gmra.mxu0 %v560
    %v613 = vpop.f32.mrf.mxu0
    %v614 = vadd.f32 0.0, %v613
    %v615 = vpop.f32.mrf.mxu0
    %v616 = vadd.f32 0.0, %v615
    %617 = vdwg.mxu0
    %s618 = scalar_lea.vmem [#allocation7], 128
    %v619 = vld [vmem:[%s618] sm:$0xff]
    %v620 = vld [vmem:[%s618 + $0x8] sm:$0xff]
    %v621 = vld [vmem:[%s618 + $0x10] sm:$0xff]
    %v622 = vld [vmem:[%s618 + $0x18] sm:$0xff]
    %v623 = vld [vmem:[%s618 + $0x20] sm:$0xff]
    %v624 = vld [vmem:[%s618 + $0x28] sm:$0xff]
    %v625 = vld [vmem:[%s618 + $0x30] sm:$0xff]
    %v626 = vld [vmem:[%s618 + $0x38] sm:$0xff]
    %v627 = vld [vmem:[%s618 + $0x40] sm:$0xff]
    %v628 = vld [vmem:[%s618 + $0x48] sm:$0xff]
    %v629 = vld [vmem:[%s618 + $0x50] sm:$0xff]
    %v630 = vld [vmem:[%s618 + $0x58] sm:$0xff]
    %v631 = vld [vmem:[%s618 + $0x60] sm:$0xff]
    %v632 = vld [vmem:[%s618 + $0x68] sm:$0xff]
    %v633 = vld [vmem:[%s618 + $0x70] sm:$0xff]
    %v634 = vld [vmem:[%s618 + $0x78] sm:$0xff]
    %635 = vmatpush.msra.mxu0 %v634
    %636 = vmatpush.msra.mxu0 %v633
    %637 = vmatpush.msra.mxu0 %v632
    %638 = vmatpush.msra.mxu0 %v631
    %639 = vmatpush.msra.mxu0 %v630
    %640 = vmatpush.msra.mxu0 %v629
    %641 = vmatpush.msra.mxu0 %v628
    %642 = vmatpush.msra.mxu0 %v627
    %643 = vmatpush.msra.mxu0 %v626
    %644 = vmatpush.msra.mxu0 %v625
    %645 = vmatpush.msra.mxu0 %v624
    %646 = vmatpush.msra.mxu0 %v623
    %647 = vmatpush.msra.mxu0 %v622
    %648 = vmatpush.msra.mxu0 %v621
    %649 = vmatpush.msra.mxu0 %v620
    %650 = vmatpush.msra.mxu0 %v619
    %651 = vmatmul.f32.gmra.mxu0 %v579
    %v652 = vpop.f32.mrf.mxu0
    %v653 = vadd.f32 0.0, %v652
    %654 = vmatmul.f32.gmra.mxu0 %v581
    %v655 = vpop.f32.mrf.mxu0
    %v656 = vadd.f32 0.0, %v655
    %657 = vmatmul.f32.gmra.mxu0 %v584
    %v658 = vpop.f32.mrf.mxu0
    %v659 = vadd.f32 0.0, %v658
    %660 = vmatmul.f32.gmra.mxu0 %v586
    %v661 = vpop.f32.mrf.mxu0
    %v662 = vadd.f32 0.0, %v661
    %663 = vmatmul.f32.gmra.mxu0 %v589
    %v664 = vpop.f32.mrf.mxu0
    %v665 = vadd.f32 0.0, %v664
    %666 = vmatmul.f32.gmra.mxu0 %v591
    %v667 = vpop.f32.mrf.mxu0
    %v668 = vadd.f32 0.0, %v667
    %669 = vmatmul.f32.gmra.mxu0 %v594
    %v670 = vpop.f32.mrf.mxu0
    %v671 = vadd.f32 0.0, %v670
    %672 = vmatmul.f32.gmra.mxu0 %v596
    %v673 = vpop.f32.mrf.mxu0
    %v674 = vadd.f32 0.0, %v673
    %675 = vmatmul.f32.gmra.mxu0 %v599
    %v676 = vpop.f32.mrf.mxu0
    %v677 = vadd.f32 0.0, %v676
    %678 = vmatmul.f32.gmra.mxu0 %v601
    %v679 = vpop.f32.mrf.mxu0
    %v680 = vadd.f32 0.0, %v679
    %681 = vmatmul.f32.gmra.mxu0 %v604
    %v682 = vpop.f32.mrf.mxu0
    %v683 = vadd.f32 0.0, %v682
    %684 = vmatmul.f32.gmra.mxu0 %v606
    %v685 = vpop.f32.mrf.mxu0
    %v686 = vadd.f32 0.0, %v685
    %687 = vmatmul.f32.gmra.mxu0 %v609
    %v688 = vpop.f32.mrf.mxu0
    %v689 = vadd.f32 0.0, %v688
    %690 = vmatmul.f32.gmra.mxu0 %v611
    %v691 = vpop.f32.mrf.mxu0
    %v692 = vadd.f32 0.0, %v691
    %693 = vmatmul.f32.gmra.mxu0 %v614
    %v694 = vpop.f32.mrf.mxu0
    %v695 = vadd.f32 0.0, %v694
    %696 = vmatmul.f32.gmra.mxu0 %v616
    %v697 = vpop.f32.mrf.mxu0
    %v698 = vadd.f32 0.0, %v697
    %699 = vdwg.mxu0
    %v700 = vadd.f32 %v488, %v653
    %v701 = vadd.f32 %v489, %v656
    %v702 = vadd.f32 %v490, %v659
    %v703 = vadd.f32 %v491, %v662
    %v704 = vadd.f32 %v492, %v665
    %v705 = vadd.f32 %v493, %v668
    %v706 = vadd.f32 %v494, %v671
    %v707 = vadd.f32 %v495, %v674
    %v708 = vadd.f32 %v496, %v677
    %v709 = vadd.f32 %v497, %v680
    %v710 = vadd.f32 %v498, %v683
    %v711 = vadd.f32 %v499, %v686
    %v712 = vadd.f32 %v500, %v689
    %v713 = vadd.f32 %v501, %v692
    %v714 = vadd.f32 %v502, %v695
    %v715 = vadd.f32 %v503, %v698
    %s716 = scalar_lea.vmem [#allocation5], 128
    %v717 = vld [vmem:[%s716] sm:$0xf]
    %v718 = vld [vmem:[%s716 + $0x4] sm:$0xf]
    %v719 = vld [vmem:[%s716 + $0x8] sm:$0xf]
    %v720 = vld [vmem:[%s716 + $0xc] sm:$0xf]
    %v721 = vld [vmem:[%s716 + $0x10] sm:$0xf]
    %v722 = vld [vmem:[%s716 + $0x14] sm:$0xf]
    %v723 = vld [vmem:[%s716 + $0x18] sm:$0xf]
    %v724 = vld [vmem:[%s716 + $0x1c] sm:$0xf]
    %v725 = vld [vmem:[%s716 + $0x20] sm:$0xf]
    %v726 = vld [vmem:[%s716 + $0x24] sm:$0xf]
    %v727 = vld [vmem:[%s716 + $0x28] sm:$0xf]
    %v728 = vld [vmem:[%s716 + $0x2c] sm:$0xf]
    %v729 = vld [vmem:[%s716 + $0x30] sm:$0xf]
    %v730 = vld [vmem:[%s716 + $0x34] sm:$0xf]
    %v731 = vld [vmem:[%s716 + $0x38] sm:$0xf]
    %v732 = vld [vmem:[%s716 + $0x3c] sm:$0xf]
    %v749 = vunpack.c.l.b16 %v717
    %v750 = vunpack.c.l.b16 %v718
    %v751 = vunpack.c.l.b16 %v719
    %v752 = vunpack.c.l.b16 %v720
    %v753 = vunpack.c.l.b16 %v721
    %v754 = vunpack.c.l.b16 %v722
    %v755 = vunpack.c.l.b16 %v723
    %v756 = vunpack.c.l.b16 %v724
    %v757 = vunpack.c.l.b16 %v725
    %v758 = vunpack.c.l.b16 %v726
    %v759 = vunpack.c.l.b16 %v727
    %v760 = vunpack.c.l.b16 %v728
    %v761 = vunpack.c.l.b16 %v729
    %v762 = vunpack.c.l.b16 %v730
    %v763 = vunpack.c.l.b16 %v731
    %v764 = vunpack.c.l.b16 %v732
    %v765 = vpack.c.b16 %v750, %v749
    %v766 = vpack.c.b16 %v752, %v751
    %v767 = vpack.c.b16 %v754, %v753
    %v768 = vpack.c.b16 %v756, %v755
    %v769 = vpack.c.b16 %v758, %v757
    %v770 = vpack.c.b16 %v760, %v759
    %v771 = vpack.c.b16 %v762, %v761
    %v772 = vpack.c.b16 %v764, %v763
    %781 = vmatpush.bf16.msra.mxu0 %v349
    %782 = vmatpush.bf16.msra.mxu0 %v348
    %783 = vmatpush.bf16.msra.mxu0 %v347
    %784 = vmatpush.bf16.msra.mxu0 %v346
    %785 = vmatpush.bf16.msra.mxu0 %v345
    %786 = vmatpush.bf16.msra.mxu0 %v344
    %787 = vmatpush.bf16.msra.mxu0 %v343
    %788 = vmatpush.bf16.msra.mxu0 %v342
    %789 = vmatmul.bf16.gmra.mxu0 %v765
    %v790 = vpop.f32.mrf.mxu0
    %v791 = vadd.f32 0.0, %v790
    %v792 = vpop.f32.mrf.mxu0
    %v793 = vadd.f32 0.0, %v792
    %794 = vmatmul.bf16.gmra.mxu0 %v766
    %v795 = vpop.f32.mrf.mxu0
    %v796 = vadd.f32 0.0, %v795
    %v797 = vpop.f32.mrf.mxu0
    %v798 = vadd.f32 0.0, %v797
    %799 = vmatmul.bf16.gmra.mxu0 %v767
    %v800 = vpop.f32.mrf.mxu0
    %v801 = vadd.f32 0.0, %v800
    %v802 = vpop.f32.mrf.mxu0
    %v803 = vadd.f32 0.0, %v802
    %804 = vmatmul.bf16.gmra.mxu0 %v768
    %v805 = vpop.f32.mrf.mxu0
    %v806 = vadd.f32 0.0, %v805
    %v807 = vpop.f32.mrf.mxu0
    %v808 = vadd.f32 0.0, %v807
    %809 = vmatmul.bf16.gmra.mxu0 %v769
    %v810 = vpop.f32.mrf.mxu0
    %v811 = vadd.f32 0.0, %v810
    %v812 = vpop.f32.mrf.mxu0
    %v813 = vadd.f32 0.0, %v812
    %814 = vmatmul.bf16.gmra.mxu0 %v770
    %v815 = vpop.f32.mrf.mxu0
    %v816 = vadd.f32 0.0, %v815
    %v817 = vpop.f32.mrf.mxu0
    %v818 = vadd.f32 0.0, %v817
    %819 = vmatmul.bf16.gmra.mxu0 %v771
    %v820 = vpop.f32.mrf.mxu0
    %v821 = vadd.f32 0.0, %v820
    %v822 = vpop.f32.mrf.mxu0
    %v823 = vadd.f32 0.0, %v822
    %824 = vmatmul.bf16.gmra.mxu0 %v772
    %v825 = vpop.f32.mrf.mxu0
    %v826 = vadd.f32 0.0, %v825
    %v827 = vpop.f32.mrf.mxu0
    %v828 = vadd.f32 0.0, %v827
    %829 = vdwg.mxu0
    %s830 = scalar_lea.vmem [#allocation7], 256
    %v831 = vld [vmem:[%s830] sm:$0xff]
    %v832 = vld [vmem:[%s830 + $0x8] sm:$0xff]
    %v833 = vld [vmem:[%s830 + $0x10] sm:$0xff]
    %v834 = vld [vmem:[%s830 + $0x18] sm:$0xff]
    %v835 = vld [vmem:[%s830 + $0x20] sm:$0xff]
    %v836 = vld [vmem:[%s830 + $0x28] sm:$0xff]
    %v837 = vld [vmem:[%s830 + $0x30] sm:$0xff]
    %v838 = vld [vmem:[%s830 + $0x38] sm:$0xff]
    %v839 = vld [vmem:[%s830 + $0x40] sm:$0xff]
    %v840 = vld [vmem:[%s830 + $0x48] sm:$0xff]
    %v841 = vld [vmem:[%s830 + $0x50] sm:$0xff]
    %v842 = vld [vmem:[%s830 + $0x58] sm:$0xff]
    %v843 = vld [vmem:[%s830 + $0x60] sm:$0xff]
    %v844 = vld [vmem:[%s830 + $0x68] sm:$0xff]
    %v845 = vld [vmem:[%s830 + $0x70] sm:$0xff]
    %v846 = vld [vmem:[%s830 + $0x78] sm:$0xff]
    %847 = vmatpush.msra.mxu0 %v846
    %848 = vmatpush.msra.mxu0 %v845
    %849 = vmatpush.msra.mxu0 %v844
    %850 = vmatpush.msra.mxu0 %v843
    %851 = vmatpush.msra.mxu0 %v842
    %852 = vmatpush.msra.mxu0 %v841
    %853 = vmatpush.msra.mxu0 %v840
    %854 = vmatpush.msra.mxu0 %v839
    %855 = vmatpush.msra.mxu0 %v838
    %856 = vmatpush.msra.mxu0 %v837
    %857 = vmatpush.msra.mxu0 %v836
    %858 = vmatpush.msra.mxu0 %v835
    %859 = vmatpush.msra.mxu0 %v834
    %860 = vmatpush.msra.mxu0 %v833
    %861 = vmatpush.msra.mxu0 %v832
    %862 = vmatpush.msra.mxu0 %v831
    %863 = vmatmul.f32.gmra.mxu0 %v791
    %v864 = vpop.f32.mrf.mxu0
    %v865 = vadd.f32 0.0, %v864
    %866 = vmatmul.f32.gmra.mxu0 %v793
    %v867 = vpop.f32.mrf.mxu0
    %v868 = vadd.f32 0.0, %v867
    %869 = vmatmul.f32.gmra.mxu0 %v796
    %v870 = vpop.f32.mrf.mxu0
    %v871 = vadd.f32 0.0, %v870
    %872 = vmatmul.f32.gmra.mxu0 %v798
    %v873 = vpop.f32.mrf.mxu0
    %v874 = vadd.f32 0.0, %v873
    %875 = vmatmul.f32.gmra.mxu0 %v801
    %v876 = vpop.f32.mrf.mxu0
    %v877 = vadd.f32 0.0, %v876
    %878 = vmatmul.f32.gmra.mxu0 %v803
    %v879 = vpop.f32.mrf.mxu0
    %v880 = vadd.f32 0.0, %v879
    %881 = vmatmul.f32.gmra.mxu0 %v806
    %v882 = vpop.f32.mrf.mxu0
    %v883 = vadd.f32 0.0, %v882
    %884 = vmatmul.f32.gmra.mxu0 %v808
    %v885 = vpop.f32.mrf.mxu0
    %v886 = vadd.f32 0.0, %v885
    %887 = vmatmul.f32.gmra.mxu0 %v811
    %v888 = vpop.f32.mrf.mxu0
    %v889 = vadd.f32 0.0, %v888
    %890 = vmatmul.f32.gmra.mxu0 %v813
    %v891 = vpop.f32.mrf.mxu0
    %v892 = vadd.f32 0.0, %v891
    %893 = vmatmul.f32.gmra.mxu0 %v816
    %v894 = vpop.f32.mrf.mxu0
    %v895 = vadd.f32 0.0, %v894
    %896 = vmatmul.f32.gmra.mxu0 %v818
    %v897 = vpop.f32.mrf.mxu0
    %v898 = vadd.f32 0.0, %v897
    %899 = vmatmul.f32.gmra.mxu0 %v821
    %v900 = vpop.f32.mrf.mxu0
    %v901 = vadd.f32 0.0, %v900
    %902 = vmatmul.f32.gmra.mxu0 %v823
    %v903 = vpop.f32.mrf.mxu0
    %v904 = vadd.f32 0.0, %v903
    %905 = vmatmul.f32.gmra.mxu0 %v826
    %v906 = vpop.f32.mrf.mxu0
    %v907 = vadd.f32 0.0, %v906
    %908 = vmatmul.f32.gmra.mxu0 %v828
    %v909 = vpop.f32.mrf.mxu0
    %v910 = vadd.f32 0.0, %v909
    %911 = vdwg.mxu0
    %v912 = vadd.f32 %v700, %v865
    %v913 = vadd.f32 %v701, %v868
    %v914 = vadd.f32 %v702, %v871
    %v915 = vadd.f32 %v703, %v874
    %v916 = vadd.f32 %v704, %v877
    %v917 = vadd.f32 %v705, %v880
    %v918 = vadd.f32 %v706, %v883
    %v919 = vadd.f32 %v707, %v886
    %v920 = vadd.f32 %v708, %v889
    %v921 = vadd.f32 %v709, %v892
    %v922 = vadd.f32 %v710, %v895
    %v923 = vadd.f32 %v711, %v898
    %v924 = vadd.f32 %v712, %v901
    %v925 = vadd.f32 %v713, %v904
    %v926 = vadd.f32 %v714, %v907
    %v927 = vadd.f32 %v715, %v910
    %v928 = vmax.f32 %v912, 0.0
    %v929 = vmax.f32 %v913, 0.0
    %v930 = vmax.f32 %v914, 0.0
    %v931 = vmax.f32 %v915, 0.0
    %v932 = vmax.f32 %v916, 0.0
    %v933 = vmax.f32 %v917, 0.0
    %v934 = vmax.f32 %v918, 0.0
    %v935 = vmax.f32 %v919, 0.0
    %v936 = vmax.f32 %v920, 0.0
    %v937 = vmax.f32 %v921, 0.0
    %v938 = vmax.f32 %v922, 0.0
    %v939 = vmax.f32 %v923, 0.0
    %v940 = vmax.f32 %v924, 0.0
    %v941 = vmax.f32 %v925, 0.0
    %v942 = vmax.f32 %v926, 0.0
    %v943 = vmax.f32 %v927, 0.0
    %944 = vst [vmem:[#allocation10] sm:$0xff] %v928
    %945 = vst [vmem:[#allocation10 + $0x8] sm:$0xff] %v929
    %946 = vst [vmem:[#allocation10 + $0x10] sm:$0xff] %v930
    %947 = vst [vmem:[#allocation10 + $0x18] sm:$0xff] %v931
    %948 = vst [vmem:[#allocation10 + $0x20] sm:$0xff] %v932
    %949 = vst [vmem:[#allocation10 + $0x28] sm:$0xff] %v933
    %950 = vst [vmem:[#allocation10 + $0x30] sm:$0xff] %v934
    %951 = vst [vmem:[#allocation10 + $0x38] sm:$0xff] %v935
    %952 = vst [vmem:[#allocation10 + $0x40] sm:$0xff] %v936
    %953 = vst [vmem:[#allocation10 + $0x48] sm:$0xff] %v937
    %954 = vst [vmem:[#allocation10 + $0x50] sm:$0xff] %v938
    %955 = vst [vmem:[#allocation10 + $0x58] sm:$0xff] %v939
    %956 = vst [vmem:[#allocation10 + $0x60] sm:$0xff] %v940
    %957 = vst [vmem:[#allocation10 + $0x68] sm:$0xff] %v941
    %958 = vst [vmem:[#allocation10 + $0x70] sm:$0xff] %v942
    %959 = vst [vmem:[#allocation10 + $0x78] sm:$0xff] %v943
    // Predicated region
    $region38: #{tpu_custom_call.1} parent=1 // pred_check
      _
    $region39: #{tpu_custom_call.1} parent=1 // pred_check_branch
      %961 = sbr.rel (0) target = $region41
    $region40: #{tpu_custom_call.1} parent=1 // pred_region
      %963 = vsyncadd [#allocation4], 0
      %s964 = sshll.u32 [#allocation10], 4
      %s965 = int_to_ptr.vmem [resolvable:$true] %s964
      %s966 = sshll.u32 %s5, 4
      %s967 = int_to_ptr.hbm [resolvable:$true] %s966
      %972 = dma.vmem_to_hbm [thread:$0]  %s965, 2048, %s967, [#allocation4], 128, 128, 8
    $region41: #{tpu_custom_call.1} parent=1 // pred_fallthru
      _
    // Predicated region
    $region42: #{tpu_custom_call.1} parent=1 // pred_check
      _
    $region43: #{tpu_custom_call.1} parent=1 // pred_check_branch
      %974 = sbr.rel (0) target = $region45
    $region44: #{tpu_custom_call.1} parent=1 // pred_region
      %976 = dma.done [#allocation4], 2048
    $region45: #{tpu_custom_call.1} parent=1 // pred_fallthru
      _
    %977 = vsyncpa [#allocation3], 1
    %978 = vsyncpa [#allocation6], 1
    %979 = vsyncpa [#allocation9], 1
    %980 = vsyncpa [#allocation4], 1

</llo_original>
